<compile_context>
chip_gen: v7x
topology: tpu7x:2x2x1
jax: 0.10.0
libtpu: 0.0.40
codegen_flags: <defaults>
</compile_context>

<pallas_src>
import jax
import jax.numpy as jnp
from jax.experimental import pallas as pl
from jax.experimental.pallas import tpu as pltpu


def _net_kernel(xT_ref, w1_ref, b1_ref, w2_ref, b2_ref, outT_ref):
    # Layer 1 (transposed): hT = relu(W1 @ xT + b1)
    #   (H, S)bf16 @ (S, TM)bf16 -> (H, TM)f32   (lane-dense intermediate)
    hT = jnp.dot(w1_ref[...], xT_ref[...], preferred_element_type=jnp.float32)
    hT = jnp.maximum(hT + b1_ref[...], 0.0)          # bias add + ReLU in f32

    # Layer 2 (transposed): outT = W2 @ hT + b2
    #   (A, H)bf16 @ (H, TM)bf16 -> (A, TM)f32   (lane-dense output tile)
    oT = jnp.dot(w2_ref[...], hT.astype(w2_ref.dtype),
                 preferred_element_type=jnp.float32)
    outT_ref[...] = (oT + b2_ref[...]).astype(outT_ref.dtype)


def net_forward(x, w1, b1, w2, b2, *, batch_tile=1024):
    """Forward pass of Net (PyTorch nn.Linear weight conventions).

    Args:
      x : (B, state_dim)
      w1: (hidden_dim, state_dim),  b1: (hidden_dim,)
      w2: (action_dim, hidden_dim), b2: (action_dim,)
    Returns:
      (B, action_dim) array with x's dtype.
    """
    B, S = x.shape
    H, S2 = w1.shape
    A, H2 = w2.shape
    assert S == S2 and H == H2 and b1.shape == (H,) and b2.shape == (A,)

    # bf16 MXU operands; put batch on the lane axis.
    xT = x.astype(jnp.bfloat16).T                  # (S, B)
    w1b = w1.astype(jnp.bfloat16)                  # (H, S)
    w2b = w2.astype(jnp.bfloat16)                  # (A, H)
    b1c = b1.astype(jnp.float32).reshape(H, 1)     # broadcasts over lanes
    b2c = b2.astype(jnp.float32).reshape(A, 1)

    # Lane-dense batch tile (multiple of 128); pad B up to a whole number of tiles.
    tm = min(batch_tile, 128 * pl.cdiv(B, 128))
    b_pad = tm * pl.cdiv(B, tm)
    if b_pad != B:
        xT = jnp.pad(xT, ((0, 0), (0, b_pad - B)))

    cost = pl.CostEstimate(
        flops=2 * b_pad * (S * H + H * A),
        transcendentals=0,
        bytes_accessed=(S * b_pad * 2 + A * b_pad * 4          # x in (bf16), out (f32)
                        + (H * S + A * H) * 2 + (H + A) * 4))  # weights + biases

    outT = pl.pallas_call(
        _net_kernel,
        out_shape=jax.ShapeDtypeStruct((A, b_pad), jnp.float32),
        grid_spec=pl.GridSpec(
            grid=(b_pad // tm,),
            in_specs=[
                pl.BlockSpec((S, tm), lambda i: (0, i)),   # x tile   (streamed)
                pl.BlockSpec((H, S), lambda i: (0, 0)),    # W1       (resident)
                pl.BlockSpec((H, 1), lambda i: (0, 0)),    # b1       (resident)
                pl.BlockSpec((A, H), lambda i: (0, 0)),    # W2       (resident)
                pl.BlockSpec((A, 1), lambda i: (0, 0)),    # b2       (resident)
            ],
            out_specs=pl.BlockSpec((A, tm), lambda i: (0, i)),
        ),
        compiler_params=pltpu.CompilerParams(
            dimension_semantics=("parallel",),   # shard batch across TCs on v7x
        ),
        cost_estimate=cost,
    )(xT, w1b, b1c, w2b, b2c)

    return outT[:, :B].T.astype(x.dtype)


def init_linear_params(key, in_features, out_features):
    """torch.nn.Linear-style init: W (out, in), b (out,), uniform +-1/sqrt(fan_in)."""
    kw, kb = jax.random.split(key)
    bound = 1.0 / (in_features ** 0.5)
    w = jax.random.uniform(kw, (out_features, in_features), jnp.float32, -bound, bound)
    b = jax.random.uniform(kb, (out_features,), jnp.float32, -bound, bound)
    return w, b


if __name__ == "__main__":
    state_dim = 4      # e.g. CartPole observation dim
    hidden_dim = 128
    action_dim = 2
    batch = 8

    key = jax.random.PRNGKey(0)
    k_x, k_fc1, k_fc2 = jax.random.split(key, 3)

    x = jax.random.normal(k_x, (batch, state_dim), jnp.float32)
    w1, b1 = init_linear_params(k_fc1, state_dim, hidden_dim)
    w2, b2 = init_linear_params(k_fc2, hidden_dim, action_dim)

    out = net_forward(x, w1, b1, w2, b2)
    out = jax.block_until_ready(out)
    assert out.shape == (batch, action_dim)

    # Reference with matching bf16 MXU inputs / f32 accumulation (tight check).
    xb, w1b, w2b = (t.astype(jnp.bfloat16) for t in (x, w1, w2))
    h_ref = jnp.maximum(
        jnp.dot(xb, w1b.T, preferred_element_type=jnp.float32) + b1, 0.0)
    ref = jnp.dot(h_ref.astype(jnp.bfloat16), w2b.T,
                  preferred_element_type=jnp.float32) + b2
    assert jnp.allclose(out, ref, atol=1e-3, rtol=1e-3), \
        float(jnp.max(jnp.abs(out - ref)))

    # Loose sanity check against the full-f32 PyTorch semantics.
    ref32 = jnp.maximum(x @ w1.T + b1, 0.0) @ w2.T + b2
    assert jnp.allclose(out, ref32, atol=1e-1, rtol=1e-1)

    print("KERNEL_OK")
</pallas_src>

<mosaic_0001>
module attributes {stable_mosaic.version = 11 : i64} {
  func.func @_net_kernel(%arg0: i32, %arg1: memref<4x128xbf16, #tpu.memory_space<vmem>>, %arg2: memref<128x4xbf16, #tpu.memory_space<vmem>>, %arg3: memref<128x1xf32, #tpu.memory_space<vmem>>, %arg4: memref<2x128xbf16, #tpu.memory_space<vmem>>, %arg5: memref<2x1xf32, #tpu.memory_space<vmem>>, %arg6: memref<2x128xf32, #tpu.memory_space<vmem>>) attributes {dimension_semantics = [#tpu.dimension_semantics<parallel>], iteration_bounds = array<i64: 1>, scalar_prefetch = 0 : i64, scratch_operands = 0 : i64, tpu.core_type = #tpu.core_type<tc>, window_params = [{transform_indices = @transform_0, window_bounds = array<i64: 4, 128>}, {pipeline_mode = #tpu.pipeline_mode<synchronous>, transform_indices = @transform_1, window_bounds = array<i64: 128, 4>}, {pipeline_mode = #tpu.pipeline_mode<synchronous>, transform_indices = @transform_2, window_bounds = array<i64: 128, 1>}, {pipeline_mode = #tpu.pipeline_mode<synchronous>, transform_indices = @transform_3, window_bounds = array<i64: 2, 128>}, {pipeline_mode = #tpu.pipeline_mode<synchronous>, transform_indices = @transform_4, window_bounds = array<i64: 2, 1>}, {transform_indices = @transform_5, window_bounds = array<i64: 2, 128>}]} {
    %c0 = arith.constant 0 : index
    %c0_0 = arith.constant 0 : index
    %0 = vector.load %arg2[%c0, %c0_0] : memref<128x4xbf16, #tpu.memory_space<vmem>>, vector<128x4xbf16>
    %c0_1 = arith.constant 0 : index
    %c0_2 = arith.constant 0 : index
    %1 = vector.load %arg1[%c0_1, %c0_2] : memref<4x128xbf16, #tpu.memory_space<vmem>>, vector<4x128xbf16>
    %cst = arith.constant dense<0.000000e+00> : vector<128x128xf32>
    %2 = tpu.matmul %0, %1, %cst {dimension_numbers = #tpu.dot_dimension_numbers<[1], [0], [0], [1], [0, 0, 1, 1], [], []>} : vector<128x4xbf16>, vector<4x128xbf16>, vector<128x128xf32> -> vector<128x128xf32>
    %c0_3 = arith.constant 0 : index
    %c0_4 = arith.constant 0 : index
    %3 = vector.load %arg3[%c0_3, %c0_4] : memref<128x1xf32, #tpu.memory_space<vmem>>, vector<128x1xf32>
    %4 = vector.broadcast %3 : vector<128x1xf32> to vector<128x128xf32>
    %5 = arith.addf %2, %4 : vector<128x128xf32>
    %cst_5 = arith.constant 0.000000e+00 : f32
    %6 = vector.broadcast %cst_5 : f32 to vector<128x128xf32>
    %7 = arith.maximumf %5, %6 : vector<128x128xf32>
    %c0_6 = arith.constant 0 : index
    %c0_7 = arith.constant 0 : index
    %8 = vector.load %arg4[%c0_6, %c0_7] : memref<2x128xbf16, #tpu.memory_space<vmem>>, vector<2x128xbf16>
    %9 = arith.truncf %7 : vector<128x128xf32> to vector<128x128xbf16>
    %cst_8 = arith.constant dense<0.000000e+00> : vector<2x128xf32>
    %10 = tpu.matmul %8, %9, %cst_8 {dimension_numbers = #tpu.dot_dimension_numbers<[1], [0], [0], [1], [0, 0, 1, 1], [], []>} : vector<2x128xbf16>, vector<128x128xbf16>, vector<2x128xf32> -> vector<2x128xf32>
    %c0_9 = arith.constant 0 : index
    %c0_10 = arith.constant 0 : index
    %11 = vector.load %arg5[%c0_9, %c0_10] : memref<2x1xf32, #tpu.memory_space<vmem>>, vector<2x1xf32>
    %12 = vector.broadcast %11 : vector<2x1xf32> to vector<2x128xf32>
    %13 = arith.addf %10, %12 : vector<2x128xf32>
    %c0_11 = arith.constant 0 : index
    %c0_12 = arith.constant 0 : index
    %14 = vector.load %arg6[%c0_11, %c0_12] : memref<2x128xf32, #tpu.memory_space<vmem>>, vector<2x128xf32>
    tpu.vector_store %arg6[%c0_11, %c0_12], %13 {strides = array<i32>} : memref<2x128xf32, #tpu.memory_space<vmem>>, vector<2x128xf32>,
    return
  }
  func.func @transform_0(%arg0: i32) -> (i32, i32) {
    %c0_i32 = arith.constant 0 : i32
    %c0_i32_0 = arith.constant 0 : i32
    return %c0_i32, %arg0 : i32, i32
  }
  func.func @transform_1(%arg0: i32) -> (i32, i32) {
    %c0_i32 = arith.constant 0 : i32
    %c0_i32_0 = arith.constant 0 : i32
    %c0_i32_1 = arith.constant 0 : i32
    return %c0_i32, %c0_i32_0 : i32, i32
  }
  func.func @transform_2(%arg0: i32) -> (i32, i32) {
    %c0_i32 = arith.constant 0 : i32
    %c0_i32_0 = arith.constant 0 : i32
    %c0_i32_1 = arith.constant 0 : i32
    return %c0_i32, %c0_i32_0 : i32, i32
  }
  func.func @transform_3(%arg0: i32) -> (i32, i32) {
    %c0_i32 = arith.constant 0 : i32
    %c0_i32_0 = arith.constant 0 : i32
    %c0_i32_1 = arith.constant 0 : i32
    return %c0_i32, %c0_i32_0 : i32, i32
  }
  func.func @transform_4(%arg0: i32) -> (i32, i32) {
    %c0_i32 = arith.constant 0 : i32
    %c0_i32_0 = arith.constant 0 : i32
    %c0_i32_1 = arith.constant 0 : i32
    return %c0_i32, %c0_i32_0 : i32, i32
  }
  func.func @transform_5(%arg0: i32) -> (i32, i32) {
    %c0_i32 = arith.constant 0 : i32
    %c0_i32_0 = arith.constant 0 : i32
    return %c0_i32, %arg0 : i32, i32
  }
}

</mosaic_0001>

<llo_original>
// kernel: tpu_custom_call.1
$region0: #{tpu_custom_call.1}
  #allocation0 [shape = 'u32[]', space=smem, size = 0x4, offset = 0x4, fixed_abs, tag = 'smem constant byte address 0x4 - core index']
  #allocation1 [shape = 'u32[144,128]{1,0:T(1,128)}', space=vmem, size = 0x12000, scoped, tag = 'internal scratch']
  %s0 = inlined_call_operand.vmem [shape: bf16[4,128], index: 0, kind: input, shape index: {}]
  %s1 = inlined_call_operand.vmem [shape: bf16[128,4], index: 1, kind: input, shape index: {}]
  %s2 = inlined_call_operand.vmem [shape: f32[128,1], index: 2, kind: input, shape index: {}]
  %s3 = inlined_call_operand.vmem [shape: bf16[2,128], index: 3, kind: input, shape index: {}]
  %s4 = inlined_call_operand.vmem [shape: f32[2,1], index: 4, kind: input, shape index: {}]
  %s5 = inlined_call_operand.hbm [shape: f32[2,128], index: 5, kind: output, shape index: {}]
  %s6 = sld [smem:[#allocation0]]
  $region30: #{tpu_custom_call.1} parent=0
    _
  %s8 = ssub.s32 1, %s6
  %s9 = scalar_select 0, %s8, %s6
  $region1: #{tpu_custom_call.1} parent=0
    #allocation2 [shape = 'u8[1024]{0}', space=vmem, size = 0x400, scoped, tag = 'output window, operand 0, single buffered']
    #allocation3 [shape = 's32[1]{0}', space=sflag, size = 0x4, scoped, tag = 'scoped memory for tpu_custom_call.1']
    %10 = vsyncpa [#allocation3], 0
    // Predicated region
    $region2: #{tpu_custom_call.1} parent=1 // pred_check
      _
    $region3: #{tpu_custom_call.1} parent=1 // pred_check_branch
      %12 = sbr.rel (0) target = $region5
    $region4: #{tpu_custom_call.1} parent=1 // pred_region
      _
    $region5: #{tpu_custom_call.1} parent=1 // pred_fallthru
      _
    // Predicated region
    $region6: #{tpu_custom_call.1} parent=1 // pred_check
      _
    $region7: #{tpu_custom_call.1} parent=1 // pred_check_branch
      %14 = sbr.rel (0) target = $region9
    $region8: #{tpu_custom_call.1} parent=1 // pred_region
      _
    $region9: #{tpu_custom_call.1} parent=1 // pred_fallthru
      _
    // Predicated region
    $region10: #{tpu_custom_call.1} parent=1 // pred_check
      _
    $region11: #{tpu_custom_call.1} parent=1 // pred_check_branch
      %16 = sbr.rel (0) target = $region13
    $region12: #{tpu_custom_call.1} parent=1 // pred_region
      _
    $region13: #{tpu_custom_call.1} parent=1 // pred_fallthru
      _
    // Predicated region
    $region14: #{tpu_custom_call.1} parent=1 // pred_check
      _
    $region15: #{tpu_custom_call.1} parent=1 // pred_check_branch
      %18 = sbr.rel (0) target = $region17
    $region16: #{tpu_custom_call.1} parent=1 // pred_region
      _
    $region17: #{tpu_custom_call.1} parent=1 // pred_fallthru
      _
    // Predicated region
    $region18: #{tpu_custom_call.1} parent=1 // pred_check
      _
    $region19: #{tpu_custom_call.1} parent=1 // pred_check_branch
      %20 = sbr.rel (0) target = $region21
    $region20: #{tpu_custom_call.1} parent=1 // pred_region
      _
    $region21: #{tpu_custom_call.1} parent=1 // pred_fallthru
      _
    %v22 = vld [vmem:[%s1] sm:$0xf]
    %v23 = vld [vmem:[%s1 + $0x4] sm:$0xf]
    %v24 = vld [vmem:[%s1 + $0x8] sm:$0xf]
    %v25 = vld [vmem:[%s1 + $0xc] sm:$0xf]
    %v26 = vld [vmem:[%s1 + $0x10] sm:$0xf]
    %v27 = vld [vmem:[%s1 + $0x14] sm:$0xf]
    %v28 = vld [vmem:[%s1 + $0x18] sm:$0xf]
    %v29 = vld [vmem:[%s1 + $0x1c] sm:$0xf]
    %v30 = vld [vmem:[%s1 + $0x20] sm:$0xf]
    %v31 = vld [vmem:[%s1 + $0x24] sm:$0xf]
    %v32 = vld [vmem:[%s1 + $0x28] sm:$0xf]
    %v33 = vld [vmem:[%s1 + $0x2c] sm:$0xf]
    %v34 = vld [vmem:[%s1 + $0x30] sm:$0xf]
    %v35 = vld [vmem:[%s1 + $0x34] sm:$0xf]
    %v36 = vld [vmem:[%s1 + $0x38] sm:$0xf]
    %v37 = vld [vmem:[%s1 + $0x3c] sm:$0xf]
    %v38 = vld [vmem:[%s0] sm:$0x3]
    %v39 = vld [vmem:[%s2] sm:$0xff]
    %v40 = vld [vmem:[%s2 + $0x8] sm:$0xff]
    %v41 = vld [vmem:[%s2 + $0x10] sm:$0xff]
    %v42 = vld [vmem:[%s2 + $0x18] sm:$0xff]
    %v43 = vld [vmem:[%s2 + $0x20] sm:$0xff]
    %v44 = vld [vmem:[%s2 + $0x28] sm:$0xff]
    %v45 = vld [vmem:[%s2 + $0x30] sm:$0xff]
    %v46 = vld [vmem:[%s2 + $0x38] sm:$0xff]
    %v47 = vld [vmem:[%s2 + $0x40] sm:$0xff]
    %v48 = vld [vmem:[%s2 + $0x48] sm:$0xff]
    %v49 = vld [vmem:[%s2 + $0x50] sm:$0xff]
    %v50 = vld [vmem:[%s2 + $0x58] sm:$0xff]
    %v51 = vld [vmem:[%s2 + $0x60] sm:$0xff]
    %v52 = vld [vmem:[%s2 + $0x68] sm:$0xff]
    %v53 = vld [vmem:[%s2 + $0x70] sm:$0xff]
    %v54 = vld [vmem:[%s2 + $0x78] sm:$0xff]
    %56 = vset.pattern.permute.xlu0 0
    %57 = vperm.xlu0 %56, %v39
    %v58 = vpop.permute.xlu0 %57
    %61 = vset.pattern.permute.xlu0 0
    %62 = vperm.xlu0 %61, %v40
    %v63 = vpop.permute.xlu0 %62
    %66 = vset.pattern.permute.xlu0 0
    %67 = vperm.xlu0 %66, %v41
    %v68 = vpop.permute.xlu0 %67
    %71 = vset.pattern.permute.xlu0 0
    %72 = vperm.xlu0 %71, %v42
    %v73 = vpop.permute.xlu0 %72
    %76 = vset.pattern.permute.xlu0 0
    %77 = vperm.xlu0 %76, %v43
    %v78 = vpop.permute.xlu0 %77
    %81 = vset.pattern.permute.xlu0 0
    %82 = vperm.xlu0 %81, %v44
    %v83 = vpop.permute.xlu0 %82
    %86 = vset.pattern.permute.xlu0 0
    %87 = vperm.xlu0 %86, %v45
    %v88 = vpop.permute.xlu0 %87
    %91 = vset.pattern.permute.xlu0 0
    %92 = vperm.xlu0 %91, %v46
    %v93 = vpop.permute.xlu0 %92
    %96 = vset.pattern.permute.xlu0 0
    %97 = vperm.xlu0 %96, %v47
    %v98 = vpop.permute.xlu0 %97
    %101 = vset.pattern.permute.xlu0 0
    %102 = vperm.xlu0 %101, %v48
    %v103 = vpop.permute.xlu0 %102
    %106 = vset.pattern.permute.xlu0 0
    %107 = vperm.xlu0 %106, %v49
    %v108 = vpop.permute.xlu0 %107
    %111 = vset.pattern.permute.xlu0 0
    %112 = vperm.xlu0 %111, %v50
    %v113 = vpop.permute.xlu0 %112
    %116 = vset.pattern.permute.xlu0 0
    %117 = vperm.xlu0 %116, %v51
    %v118 = vpop.permute.xlu0 %117
    %121 = vset.pattern.permute.xlu0 0
    %122 = vperm.xlu0 %121, %v52
    %v123 = vpop.permute.xlu0 %122
    %126 = vset.pattern.permute.xlu0 0
    %127 = vperm.xlu0 %126, %v53
    %v128 = vpop.permute.xlu0 %127
    %131 = vset.pattern.permute.xlu0 0
    %132 = vperm.xlu0 %131, %v54
    %v133 = vpop.permute.xlu0 %132
    %v151 = vunpack.c.l.b16 %v22
    %v152 = vunpack.c.l.b16 %v23
    %v153 = vunpack.c.l.b16 %v24
    %v154 = vunpack.c.l.b16 %v25
    %v155 = vunpack.c.l.b16 %v26
    %v156 = vunpack.c.l.b16 %v27
    %v157 = vunpack.c.l.b16 %v28
    %v158 = vunpack.c.l.b16 %v29
    %v159 = vunpack.c.l.b16 %v30
    %v160 = vunpack.c.l.b16 %v31
    %v161 = vunpack.c.l.b16 %v32
    %v162 = vunpack.c.l.b16 %v33
    %v163 = vunpack.c.l.b16 %v34
    %v164 = vunpack.c.l.b16 %v35
    %v165 = vunpack.c.l.b16 %v36
    %v166 = vunpack.c.l.b16 %v37
    %v167 = vpack.c.b16 %v152, %v151
    %v168 = vpack.c.b16 %v154, %v153
    %v169 = vpack.c.b16 %v156, %v155
    %v170 = vpack.c.b16 %v158, %v157
    %v171 = vpack.c.b16 %v160, %v159
    %v172 = vpack.c.b16 %v162, %v161
    %v173 = vpack.c.b16 %v164, %v163
    %v174 = vpack.c.b16 %v166, %v165
    %vm175 = vcmask 31744
    %v177 = vsel %vm175, %v167, 0
    %v180 = vsel %vm175, %v168, 0
    %v183 = vsel %vm175, %v169, 0
    %v186 = vsel %vm175, %v170, 0
    %v189 = vsel %vm175, %v171, 0
    %v192 = vsel %vm175, %v172, 0
    %v195 = vsel %vm175, %v173, 0
    %v198 = vsel %vm175, %v174, 0
    %vm200 = vcmask 1041408
    %v202 = vsel %vm200, %v38, 0
    %204 = vmatprep.subr.bf16.mxu0 0
    %205 = vmatpush1.bf16.msra.mxu0 %v202
    %206 = vmatprep.subr.bf16.mxu0 0
    %207 = vmatpush1.bf16.msra.mxu0 0
    %208 = vmatprep.subr.bf16.mxu0 0
    %209 = vmatpush1.bf16.msra.mxu0 0
    %210 = vmatprep.subr.bf16.mxu0 0
    %211 = vmatpush1.bf16.msra.mxu0 0
    %212 = vmatprep.subr.bf16.mxu0 0
    %213 = vmatpush1.bf16.msra.mxu0 0
    %214 = vmatprep.subr.bf16.mxu0 0
    %215 = vmatpush1.bf16.msra.mxu0 0
    %216 = vmatprep.subr.bf16.mxu0 0
    %217 = vmatpush1.bf16.msra.mxu0 0
    %218 = vmatprep.subr.bf16.mxu0 0
    %219 = vmatpush1.bf16.msra.mxu0 0
    %220 = vmatprep.subr.bf16.mxu0 0
    %221 = vmatpush1.bf16.msra.mxu0 0
    %222 = vmatprep.subr.bf16.mxu0 0
    %223 = vmatpush1.bf16.msra.mxu0 0
    %224 = vmatprep.subr.bf16.mxu0 0
    %225 = vmatpush1.bf16.msra.mxu0 0
    %226 = vmatprep.subr.bf16.mxu0 0
    %227 = vmatpush1.bf16.msra.mxu0 0
    %228 = vmatprep.subr.bf16.mxu0 0
    %229 = vmatpush1.bf16.msra.mxu0 0
    %230 = vmatprep.subr.bf16.mxu0 0
    %231 = vmatpush1.bf16.msra.mxu0 0
    %232 = vmatprep.subr.bf16.mxu0 0
    %233 = vmatpush1.bf16.msra.mxu0 0
    %234 = vmatprep.subr.bf16.mxu0 0
    %235 = vmatpush1.bf16.msra.mxu0 0
    %236 = vmatprep.mubr.bf16.mxu0 0
    %237 = vmatmul.mubr.bf16.gmra.mrb[0].mxu0 %v177
    %v238 = vpop.f32.mrb[0].mxu0
    %v239 = vadd.f32 %v58, %v238
    %v240 = vpop.f32.mrb[0].mxu0
    %v241 = vpop.f32.mrb[0].mxu0
    %v242 = vadd.f32 %v63, %v241
    %v243 = vpop.f32.mrb[0].mxu0
    %244 = vmatprep.mubr.bf16.mxu0 0
    %245 = vmatmul.mubr.bf16.gmra.mrb[0].mxu0 %v180
    %v246 = vpop.f32.mrb[0].mxu0
    %v247 = vadd.f32 %v68, %v246
    %v248 = vpop.f32.mrb[0].mxu0
    %v249 = vpop.f32.mrb[0].mxu0
    %v250 = vadd.f32 %v73, %v249
    %v251 = vpop.f32.mrb[0].mxu0
    %252 = vmatprep.mubr.bf16.mxu0 0
    %253 = vmatmul.mubr.bf16.gmra.mrb[0].mxu0 %v183
    %v254 = vpop.f32.mrb[0].mxu0
    %v255 = vadd.f32 %v78, %v254
    %v256 = vpop.f32.mrb[0].mxu0
    %v257 = vpop.f32.mrb[0].mxu0
    %v258 = vadd.f32 %v83, %v257
    %v259 = vpop.f32.mrb[0].mxu0
    %260 = vmatprep.mubr.bf16.mxu0 0
    %261 = vmatmul.mubr.bf16.gmra.mrb[0].mxu0 %v186
    %v262 = vpop.f32.mrb[0].mxu0
    %v263 = vadd.f32 %v88, %v262
    %v264 = vpop.f32.mrb[0].mxu0
    %v265 = vpop.f32.mrb[0].mxu0
    %v266 = vadd.f32 %v93, %v265
    %v267 = vpop.f32.mrb[0].mxu0
    %268 = vmatprep.mubr.bf16.mxu0 0
    %269 = vmatmul.mubr.bf16.gmra.mrb[0].mxu0 %v189
    %v270 = vpop.f32.mrb[0].mxu0
    %v271 = vadd.f32 %v98, %v270
    %v272 = vpop.f32.mrb[0].mxu0
    %v273 = vpop.f32.mrb[0].mxu0
    %v274 = vadd.f32 %v103, %v273
    %v275 = vpop.f32.mrb[0].mxu0
    %276 = vmatprep.mubr.bf16.mxu0 0
    %277 = vmatmul.mubr.bf16.gmra.mrb[0].mxu0 %v192
    %v278 = vpop.f32.mrb[0].mxu0
    %v279 = vadd.f32 %v108, %v278
    %v280 = vpop.f32.mrb[0].mxu0
    %v281 = vpop.f32.mrb[0].mxu0
    %v282 = vadd.f32 %v113, %v281
    %v283 = vpop.f32.mrb[0].mxu0
    %284 = vmatprep.mubr.bf16.mxu0 0
    %285 = vmatmul.mubr.bf16.gmra.mrb[0].mxu0 %v195
    %v286 = vpop.f32.mrb[0].mxu0
    %v287 = vadd.f32 %v118, %v286
    %v288 = vpop.f32.mrb[0].mxu0
    %v289 = vpop.f32.mrb[0].mxu0
    %v290 = vadd.f32 %v123, %v289
    %v291 = vpop.f32.mrb[0].mxu0
    %292 = vmatprep.mubr.bf16.mxu0 0
    %293 = vmatmul.mubr.bf16.gmra.mrb[0].mxu0 %v198
    %v294 = vpop.f32.mrb[0].mxu0
    %v295 = vadd.f32 %v128, %v294
    %v296 = vpop.f32.mrb[0].mxu0
    %v297 = vpop.f32.mrb[0].mxu0
    %v298 = vadd.f32 %v133, %v297
    %v299 = vpop.f32.mrb[0].mxu0
    %300 = vdwg.mxu0
    %v301 = vmax.f32 %v239, 0.0
    %v302 = vmax.f32 %v242, 0.0
    %v303 = vmax.f32 %v247, 0.0
    %v304 = vmax.f32 %v250, 0.0
    %v305 = vmax.f32 %v255, 0.0
    %v306 = vmax.f32 %v258, 0.0
    %v307 = vmax.f32 %v263, 0.0
    %v308 = vmax.f32 %v266, 0.0
    %v309 = vmax.f32 %v271, 0.0
    %v310 = vmax.f32 %v274, 0.0
    %v311 = vmax.f32 %v279, 0.0
    %v312 = vmax.f32 %v282, 0.0
    %v313 = vmax.f32 %v287, 0.0
    %v314 = vmax.f32 %v290, 0.0
    %v315 = vmax.f32 %v295, 0.0
    %v316 = vmax.f32 %v298, 0.0
    %v317 = vld [vmem:[%s3] sm:$0x1]
    %v318 = vpack.c.bf16 %v302, %v301
    %v319 = vpack.c.bf16 %v304, %v303
    %v320 = vpack.c.bf16 %v306, %v305
    %v321 = vpack.c.bf16 %v308, %v307
    %v322 = vpack.c.bf16 %v310, %v309
    %v323 = vpack.c.bf16 %v312, %v311
    %v324 = vpack.c.bf16 %v314, %v313
    %v325 = vpack.c.bf16 %v316, %v315
    %v326 = vld [vmem:[%s4] sm:$0x3]
    %328 = vset.pattern.permute.xlu0 0
    %329 = vperm.xlu0 %328, %v326
    %v330 = vpop.permute.xlu0 %329
    %332 = vmatprep.subr.bf16.mxu0 0
    %333 = vmatpush1.bf16.msra.mxu0 %v318
    %334 = vmatprep.subr.bf16.mxu0 0
    %335 = vmatpush1.bf16.msra.mxu0 %v319
    %336 = vmatprep.subr.bf16.mxu0 0
    %337 = vmatpush1.bf16.msra.mxu0 %v320
    %338 = vmatprep.subr.bf16.mxu0 0
    %339 = vmatpush1.bf16.msra.mxu0 %v321
    %340 = vmatprep.subr.bf16.mxu0 0
    %341 = vmatpush1.bf16.msra.mxu0 %v322
    %342 = vmatprep.subr.bf16.mxu0 0
    %343 = vmatpush1.bf16.msra.mxu0 %v323
    %344 = vmatprep.subr.bf16.mxu0 0
    %345 = vmatpush1.bf16.msra.mxu0 %v324
    %346 = vmatprep.subr.bf16.mxu0 0
    %347 = vmatpush1.bf16.msra.mxu0 %v325
    %348 = vmatprep.subr.bf16.mxu0 0
    %349 = vmatpush1.bf16.msra.mxu0 0
    %350 = vmatprep.subr.bf16.mxu0 0
    %351 = vmatpush1.bf16.msra.mxu0 0
    %352 = vmatprep.subr.bf16.mxu0 0
    %353 = vmatpush1.bf16.msra.mxu0 0
    %354 = vmatprep.subr.bf16.mxu0 0
    %355 = vmatpush1.bf16.msra.mxu0 0
    %356 = vmatprep.subr.bf16.mxu0 0
    %357 = vmatpush1.bf16.msra.mxu0 0
    %358 = vmatprep.subr.bf16.mxu0 0
    %359 = vmatpush1.bf16.msra.mxu0 0
    %360 = vmatprep.subr.bf16.mxu0 0
    %361 = vmatpush1.bf16.msra.mxu0 0
    %362 = vmatprep.subr.bf16.mxu0 0
    %363 = vmatpush1.bf16.msra.mxu0 0
    %364 = vmatprep.mubr.bf16.mxu0 0
    %365 = vmatmul.mubr.bf16.gmra.mrb[0].mxu0 %v317
    %v366 = vpop.f32.mrb[0].mxu0
    %v367 = vadd.f32 %v330, %v366
    %v368 = vpop.f32.mrb[0].mxu0
    %v369 = vpop.f32.mrb[0].mxu0
    %v370 = vpop.f32.mrb[0].mxu0
    %371 = vdwg.mxu0
    %372 = vst [vmem:[#allocation2] sm:$0x3] %v367
    // Predicated region
    $region22: #{tpu_custom_call.1} parent=1 // pred_check
      _
    $region23: #{tpu_custom_call.1} parent=1 // pred_check_branch
      %374 = sbr.rel (0) target = $region25
    $region24: #{tpu_custom_call.1} parent=1 // pred_region
      %s376 = ssub.s32 32, 32
      %377 = vsyncadd [#allocation3], %s376
      %s379 = sshll.u32 [#allocation2], 4
      %s380 = int_to_ptr.vmem [resolvable:$true] %s379
      %382 = dma.vmem_to_hbm [thread:$0]  %s380, 32, %s5, [#allocation3]
    $region25: #{tpu_custom_call.1} parent=1 // pred_fallthru
      _
    // Predicated region
    $region26: #{tpu_custom_call.1} parent=1 // pred_check
      _
    $region27: #{tpu_custom_call.1} parent=1 // pred_check_branch
      %384 = sbr.rel (0) target = $region29
    $region28: #{tpu_custom_call.1} parent=1 // pred_region
      %385 = dma.done [#allocation3], 32
    $region29: #{tpu_custom_call.1} parent=1 // pred_fallthru
      _
    %386 = vsyncpa [#allocation3], 1

</llo_original>
